<compile_context>
chip_gen: v7x
topology: tpu7x:2x2x1
jax: 0.10.0
libtpu: 0.0.40
codegen_flags: <defaults>
</compile_context>

<pallas_src>
import functools

import jax
import jax.numpy as jnp
from jax.experimental import pallas as pl
from jax.experimental.pallas import tpu as pltpu


def _round_up(v, m):
    return (v + m - 1) // m * m


def _pick_divisor_tile(padded, max_tile, unit=128):
    """Largest multiple of `unit` that divides `padded` and is <= max_tile."""
    best = unit
    c = unit
    while c <= min(max_tile, padded):
        if padded % c == 0:
            best = c
        c += unit
    return best


# ----------------------------------------------------------------------------
# Path 1: scalar (1 -> 1) linear.  Pure VPU, SMEM scalars, lane-dense output.
# ----------------------------------------------------------------------------
def _scalar_linear_kernel(wb_ref, x_ref, o_ref):
    # y = x * w + b  -- one fused VPU multiply-add, no MXU push/pop.
    # NOTE: the padded tail of the block gets `b` written into it; it is
    # discarded by the wrapper slice and never consumed.
    w = wb_ref[0]
    b = wb_ref[1]
    o_ref[...] = (x_ref[...] * w + b).astype(o_ref.dtype)


def _scalar_linear_forward(x, weight, bias, *, row_tile_max=1024):
    n = x.shape[0]
    # weight: (1, 1), bias: (1,)  ->  packed SMEM scalars [w, b]
    wb = jnp.stack([weight.reshape(()), bias.reshape(())]).astype(jnp.float32)

    # Lay the batch dim out lane-dense: (rows, 1024) with 1024 on the lane axis,
    # so stores are wide unmasked vst instead of width-1 masked partial stores.
    LANE = 1024
    rows = pl.cdiv(n, LANE)
    rows_p = _round_up(rows, 8)            # minimal sublane-aligned padding only
    total = rows_p * LANE

    x_flat = x.reshape(-1)
    if total != n:
        x_flat = jnp.pad(x_flat, (0, total - n))
    x2d = x_flat.reshape(rows_p, LANE)

    # Big tiles (up to 4 MiB f32) so per-grid-step overhead is negligible vs DMA.
    row_tile = min(row_tile_max, rows_p)
    grid = (pl.cdiv(rows_p, row_tile),)    # ragged last block handled by Pallas

    out2d = pl.pallas_call(
        _scalar_linear_kernel,
        out_shape=jax.ShapeDtypeStruct((rows_p, LANE), x.dtype),
        grid_spec=pltpu.PrefetchScalarGridSpec(
            num_scalar_prefetch=0,
            grid=grid,
            in_specs=[
                pl.BlockSpec(memory_space=pltpu.MemorySpace.SMEM),   # [w, b]
                pl.BlockSpec((row_tile, LANE), lambda i: (i, 0)),
            ],
            out_specs=pl.BlockSpec((row_tile, LANE), lambda i: (i, 0)),
        ),
        compiler_params=pltpu.CompilerParams(
            dimension_semantics=("parallel",),
            vmem_limit_bytes=32 * 1024 * 1024,   # v7x-safe; tiles use ~16 MiB max
        ),
    )(wb, x2d)

    return out2d.reshape(-1)[:n].reshape(n, 1)


# ----------------------------------------------------------------------------
# Path 2: general tiled MXU linear (used when sizes grow beyond the toy case).
# ----------------------------------------------------------------------------
def _tiled_linear_kernel(x_ref, w_ref, b_ref, o_ref, acc_ref, *, compute_dtype):
    k = pl.program_id(2)

    @pl.when(k == 0)
    def _():
        # Fold bias into the accumulator init (off the finalize path).
        acc_ref[...] = jnp.broadcast_to(
            b_ref[...].astype(jnp.float32), acc_ref.shape)

    # Weight is consumed in its native (out_f, in_f) layout: contract the last
    # dim of both operands (the QK^T pattern) -- no wrapper-side transpose and
    # no in-kernel relayout.  Operands are cast to bf16 for the MXU; the VMEM
    # accumulator stays f32.
    acc_ref[...] += jax.lax.dot_general(
        x_ref[...].astype(compute_dtype),
        w_ref[...].astype(compute_dtype),
        dimension_numbers=(((1,), (1,)), ((), ())),
        preferred_element_type=jnp.float32,
    )

    @pl.when(k == pl.num_programs(2) - 1)
    def _():
        o_ref[...] = acc_ref[...].astype(o_ref.dtype)


def _tiled_linear_forward(x, weight, bias, *,
                          tm_max=512, tn_max=512, tk_max=1024, use_bf16=True):
    n, in_f = x.shape
    out_f = weight.shape[0]

    # Padded extents are minimal (128-lane multiples); tiles are chosen to
    # DIVIDE them so no padded N/K columns are computed or DMA'd needlessly.
    m_p = _round_up(out_f, 128)
    k_p = _round_up(in_f, 128)
    tn = _pick_divisor_tile(m_p, tn_max)
    tk = _pick_divisor_tile(k_p, tk_max)

    n_p8 = _round_up(n, 8)
    tm = min(tm_max, n_p8)
    n_p = _round_up(n_p8, tm)

    # If the parallel (i, j) grid collapses to a single block, split M so both
    # v7x TensorCores get work (no-op cost on single-TC v5e/v6e).
    if (n_p // tm) * (m_p // tn) == 1 and n_p % 16 == 0:
        tm = n_p // 2

    x_p = x if (n_p == n and k_p == in_f) else \
        jnp.pad(x, ((0, n_p - n), (0, k_p - in_f)))
    w_p = weight if (m_p == out_f and k_p == in_f) else \
        jnp.pad(weight, ((0, m_p - out_f), (0, k_p - in_f)))
    b_p = jnp.pad(bias.reshape(1, -1).astype(jnp.float32),
                  ((0, 0), (0, m_p - out_f)))

    grid = (n_p // tm, m_p // tn, k_p // tk)
    compute_dtype = jnp.bfloat16 if use_bf16 else x.dtype
    kernel = functools.partial(_tiled_linear_kernel, compute_dtype=compute_dtype)

    cost = pl.CostEstimate(
        flops=2 * n_p * m_p * k_p,
        transcendentals=0,
        bytes_accessed=int(x_p.size * x_p.dtype.itemsize
                           + w_p.size * w_p.dtype.itemsize
                           + b_p.size * 4
                           + n_p * m_p * x.dtype.itemsize),
    )

    out = pl.pallas_call(
        kernel,
        out_shape=jax.ShapeDtypeStruct((n_p, m_p), x.dtype),
        grid_spec=pltpu.PrefetchScalarGridSpec(
            num_scalar_prefetch=0,
            grid=grid,
            in_specs=[
                pl.BlockSpec((tm, tk), lambda i, j, k: (i, k)),
                pl.BlockSpec((tn, tk), lambda i, j, k: (j, k)),
                # bias block index is constant across K -> stays resident
                pl.BlockSpec((1, tn), lambda i, j, k: (0, j)),
            ],
            out_specs=pl.BlockSpec((tm, tn), lambda i, j, k: (i, j)),
            scratch_shapes=[pltpu.VMEM((tm, tn), jnp.float32)],
        ),
        compiler_params=pltpu.CompilerParams(
            dimension_semantics=("parallel", "parallel", "arbitrary"),
            # ~11-13 MiB of tiles at the max config; 32 MiB is safe on v7x's
            # 64 MiB VMEM and on v5e/v6e.
            vmem_limit_bytes=32 * 1024 * 1024,
        ),
        cost_estimate=cost,
    )(x_p, w_p, b_p)

    return out[:n, :out_f]


# ----------------------------------------------------------------------------
# Public entry point: PyTorch-style Linear forward.
# ----------------------------------------------------------------------------
def linear_forward(x, weight, bias):
    """Pallas equivalent of torch.nn.Linear(input_size, output_size)(x)."""
    out_f, in_f = weight.shape
    if in_f == 1 and out_f == 1:
        return _scalar_linear_forward(x, weight, bias)
    return _tiled_linear_forward(x, weight, bias)


if __name__ == "__main__":
    key = jax.random.PRNGKey(0)
    kx, kw, kb = jax.random.split(key, 3)

    input_size, output_size = 1, 1
    n = 100

    # Input mirrors `x = torch.randn(100, 1) * 10`
    x = jax.random.normal(kx, (n, input_size), dtype=jnp.float32) * 10.0

    # nn.Linear default init: U(-1/sqrt(fan_in), 1/sqrt(fan_in))
    bound = 1.0 / (input_size ** 0.5)
    weight = jax.random.uniform(
        kw, (output_size, input_size), dtype=jnp.float32, minval=-bound, maxval=bound
    )
    bias = jax.random.uniform(
        kb, (output_size,), dtype=jnp.float32, minval=-bound, maxval=bound
    )

    # --- main path (matches the PyTorch module's shapes) ---
    pred = jax.block_until_ready(linear_forward(x, weight, bias))
    ref = x @ weight.T + bias
    assert pred.shape == (n, output_size)
    assert jnp.allclose(pred, ref, atol=1e-5, rtol=1e-5)

    # --- sanity-check the general tiled MXU path at a moderate size ---
    k2 = jax.random.PRNGKey(1)
    ka, kwa, kba = jax.random.split(k2, 3)
    n2, in2, out2 = 512, 1024, 384
    x2 = jax.random.normal(ka, (n2, in2), dtype=jnp.float32)
    w2 = jax.random.normal(kwa, (out2, in2), dtype=jnp.float32) * 0.02
    b2 = jax.random.normal(kba, (out2,), dtype=jnp.float32)

    pred2 = jax.block_until_ready(linear_forward(x2, w2, b2))
    # Reference with the same bf16-operand / f32-accumulate math the MXU does.
    ref2 = jnp.dot(x2.astype(jnp.bfloat16), w2.T.astype(jnp.bfloat16),
                   preferred_element_type=jnp.float32) + b2
    assert pred2.shape == (n2, out2)
    assert jnp.allclose(pred2, ref2, atol=1e-3, rtol=1e-3)

    print("KERNEL_OK")
</pallas_src>

<mosaic_0001>
module attributes {stable_mosaic.version = 11 : i64} {
  func.func @_scalar_linear_kernel(%arg0: i32, %arg1: memref<2xf32, #tpu.memory_space<smem>>, %arg2: memref<8x1024xf32, #tpu.memory_space<vmem>>, %arg3: memref<8x1024xf32, #tpu.memory_space<vmem>>) attributes {dimension_semantics = [#tpu.dimension_semantics<parallel>], iteration_bounds = array<i64: 1>, scalar_prefetch = 0 : i64, scratch_operands = 0 : i64, tpu.core_type = #tpu.core_type<tc>, window_params = [{transform_indices = @transform_0, window_bounds = array<i64: 2>}, {transform_indices = @transform_1, window_bounds = array<i64: 8, 1024>}, {transform_indices = @transform_2, window_bounds = array<i64: 8, 1024>}]} {
    %c0 = arith.constant 0 : index
    %0 = memref.load %arg1[%c0] : memref<2xf32, #tpu.memory_space<smem>>
    %c1 = arith.constant 1 : index
    %1 = memref.load %arg1[%c1] : memref<2xf32, #tpu.memory_space<smem>>
    %c0_0 = arith.constant 0 : index
    %c0_1 = arith.constant 0 : index
    %2 = vector.load %arg2[%c0_0, %c0_1] : memref<8x1024xf32, #tpu.memory_space<vmem>>, vector<8x1024xf32>
    %3 = vector.broadcast %0 : f32 to vector<8x1024xf32>
    %4 = arith.mulf %2, %3 : vector<8x1024xf32>
    %5 = vector.broadcast %1 : f32 to vector<8x1024xf32>
    %6 = arith.addf %4, %5 : vector<8x1024xf32>
    %c0_2 = arith.constant 0 : index
    %c0_3 = arith.constant 0 : index
    %7 = vector.load %arg3[%c0_2, %c0_3] : memref<8x1024xf32, #tpu.memory_space<vmem>>, vector<8x1024xf32>
    tpu.vector_store %arg3[%c0_2, %c0_3], %6 {strides = array<i32>} : memref<8x1024xf32, #tpu.memory_space<vmem>>, vector<8x1024xf32>,
    return
  }
  func.func @transform_0(%arg0: i32) -> i32 {
    %c0_i32 = arith.constant 0 : i32
    %c0_i32_0 = arith.constant 0 : i32
    return %c0_i32 : i32
  }
  func.func @transform_1(%arg0: i32) -> (i32, i32) {
    %c0_i32 = arith.constant 0 : i32
    %c0_i32_0 = arith.constant 0 : i32
    return %arg0, %c0_i32 : i32, i32
  }
  func.func @transform_2(%arg0: i32) -> (i32, i32) {
    %c0_i32 = arith.constant 0 : i32
    %c0_i32_0 = arith.constant 0 : i32
    return %arg0, %c0_i32 : i32, i32
  }
}

</mosaic_0001>

<llo_original>
// kernel: tpu_custom_call.1
$region0: #{tpu_custom_call.1}
  #allocation0 [shape = 'u32[]', space=smem, size = 0x4, offset = 0x4, fixed_abs, tag = 'smem constant byte address 0x4 - core index']
  #allocation1 [shape = 'u32[144,128]{1,0:T(1,128)}', space=vmem, size = 0x12000, scoped, tag = 'internal scratch']
  %s0 = inlined_call_operand.hbm [shape: f32[2], index: 0, kind: input, shape index: {}]
  %s1 = inlined_call_operand.hbm [shape: f32[8,1024], index: 1, kind: input, shape index: {}]
  %s2 = inlined_call_operand.hbm [shape: f32[8,1024], index: 2, kind: output, shape index: {}]
  %s3 = sld [smem:[#allocation0]]
  $region26: #{tpu_custom_call.1} parent=0
    _
  %s5 = ssub.s32 1, %s3
  %s6 = scalar_select 0, %s5, %s3
  $region1: #{tpu_custom_call.1} parent=0
    #allocation2 [shape = 'u8[512]{0}', space=smem, size = 0x200, scoped, tag = 'input window, operand 0, single buffered']
    #allocation3 [shape = 's32[1]{0}', space=sflag, size = 0x4, scoped, tag = 'scoped memory for tpu_custom_call.1']
    #allocation4 [shape = 's32[1]{0}', space=sflag, size = 0x4, scoped, tag = 'scoped memory for tpu_custom_call.1']
    #allocation5 [shape = 's32[1]{0}', space=sflag, size = 0x4, scoped, tag = 'scoped memory for tpu_custom_call.1']
    #allocation6 [shape = 'u8[32768]{0}', space=vmem, size = 0x8000, scoped, tag = 'input window, operand 1, single buffered']
    #allocation7 [shape = 'u8[32768]{0}', space=vmem, size = 0x8000, scoped, tag = 'output window, operand 0, single buffered']
    %7 = vsyncpa [#allocation5], 0
    %8 = vsyncpa [#allocation3], 0
    %9 = vsyncpa [#allocation4], 0
    // Predicated region
    $region2: #{tpu_custom_call.1} parent=1 // pred_check
      _
    $region3: #{tpu_custom_call.1} parent=1 // pred_check_branch
      %11 = sbr.rel (0) target = $region5
    $region4: #{tpu_custom_call.1} parent=1 // pred_region
      %s13 = ssub.s32 16, 16
      %14 = vsyncadd [#allocation5], %s13
      %17 = dma.hbm_to_smem %s0, 16, [#allocation2], [#allocation5]
    $region5: #{tpu_custom_call.1} parent=1 // pred_fallthru
      _
    // Predicated region
    $region6: #{tpu_custom_call.1} parent=1 // pred_check
      _
    $region7: #{tpu_custom_call.1} parent=1 // pred_check_branch
      %19 = sbr.rel (0) target = $region9
    $region8: #{tpu_custom_call.1} parent=1 // pred_region
      %s21 = ssub.s32 1024, 1024
      %22 = vsyncadd [#allocation3], %s21
      %s24 = sshll.u32 [#allocation6], 4
      %s25 = int_to_ptr.vmem [resolvable:$true] %s24
      %27 = dma.hbm_to_vmem [thread:$0]  %s1, 1024, %s25, [#allocation3]
    $region9: #{tpu_custom_call.1} parent=1 // pred_fallthru
      _
    // Predicated region
    $region10: #{tpu_custom_call.1} parent=1 // pred_check
      _
    $region11: #{tpu_custom_call.1} parent=1 // pred_check_branch
      %29 = sbr.rel (0) target = $region13
    $region12: #{tpu_custom_call.1} parent=1 // pred_region
      %30 = dma.done [#allocation5], 16
    $region13: #{tpu_custom_call.1} parent=1 // pred_fallthru
      _
    // Predicated region
    $region14: #{tpu_custom_call.1} parent=1 // pred_check
      _
    $region15: #{tpu_custom_call.1} parent=1 // pred_check_branch
      %32 = sbr.rel (0) target = $region17
    $region16: #{tpu_custom_call.1} parent=1 // pred_region
      %33 = dma.done [#allocation3], 1024
    $region17: #{tpu_custom_call.1} parent=1 // pred_fallthru
      _
    %34 = sfence
    %s35 = sld [smem:[#allocation2]]
    %s36 = sld [smem:[#allocation2 + $0x1]]
    %v37 = vld [vmem:[#allocation6] sm:$0xff]
    %v38 = vld [vmem:[#allocation6 + $0x8] sm:$0xff]
    %v39 = vld [vmem:[#allocation6 + $0x10] sm:$0xff]
    %v40 = vld [vmem:[#allocation6 + $0x18] sm:$0xff]
    %v41 = vld [vmem:[#allocation6 + $0x20] sm:$0xff]
    %v42 = vld [vmem:[#allocation6 + $0x28] sm:$0xff]
    %v43 = vld [vmem:[#allocation6 + $0x30] sm:$0xff]
    %v44 = vld [vmem:[#allocation6 + $0x38] sm:$0xff]
    %v45 = vstv %s35
    %v46 = vmul.f32 %v37, %v45
    %v47 = vmul.f32 %v38, %v45
    %v48 = vmul.f32 %v39, %v45
    %v49 = vmul.f32 %v40, %v45
    %v50 = vmul.f32 %v41, %v45
    %v51 = vmul.f32 %v42, %v45
    %v52 = vmul.f32 %v43, %v45
    %v53 = vmul.f32 %v44, %v45
    %v54 = vstv %s36
    %v55 = vadd.f32 %v46, %v54
    %v56 = vadd.f32 %v47, %v54
    %v57 = vadd.f32 %v48, %v54
    %v58 = vadd.f32 %v49, %v54
    %v59 = vadd.f32 %v50, %v54
    %v60 = vadd.f32 %v51, %v54
    %v61 = vadd.f32 %v52, %v54
    %v62 = vadd.f32 %v53, %v54
    %63 = vst [vmem:[#allocation7] sm:$0xff] %v55
    %64 = vst [vmem:[#allocation7 + $0x8] sm:$0xff] %v56
    %65 = vst [vmem:[#allocation7 + $0x10] sm:$0xff] %v57
    %66 = vst [vmem:[#allocation7 + $0x18] sm:$0xff] %v58
    %67 = vst [vmem:[#allocation7 + $0x20] sm:$0xff] %v59
    %68 = vst [vmem:[#allocation7 + $0x28] sm:$0xff] %v60
    %69 = vst [vmem:[#allocation7 + $0x30] sm:$0xff] %v61
    %70 = vst [vmem:[#allocation7 + $0x38] sm:$0xff] %v62
    // Predicated region
    $region18: #{tpu_custom_call.1} parent=1 // pred_check
      _
    $region19: #{tpu_custom_call.1} parent=1 // pred_check_branch
      %72 = sbr.rel (0) target = $region21
    $region20: #{tpu_custom_call.1} parent=1 // pred_region
      %s74 = ssub.s32 1024, 1024
      %75 = vsyncadd [#allocation4], %s74
      %s77 = sshll.u32 [#allocation7], 4
      %s78 = int_to_ptr.vmem [resolvable:$true] %s77
      %80 = dma.vmem_to_hbm [thread:$0]  %s78, 1024, %s2, [#allocation4]
    $region21: #{tpu_custom_call.1} parent=1 // pred_fallthru
      _
    // Predicated region
    $region22: #{tpu_custom_call.1} parent=1 // pred_check
      _
    $region23: #{tpu_custom_call.1} parent=1 // pred_check_branch
      %82 = sbr.rel (0) target = $region25
    $region24: #{tpu_custom_call.1} parent=1 // pred_region
      %83 = dma.done [#allocation4], 1024
    $region25: #{tpu_custom_call.1} parent=1 // pred_fallthru
      _
    %84 = vsyncpa [#allocation3], 1
    %85 = vsyncpa [#allocation4], 1
    %86 = vsyncpa [#allocation5], 1

</llo_original>
